<compile_context>
chip_gen: v7x
topology: tpu7x:2x2x1
jax: 0.10.0
libtpu: 0.0.40
codegen_flags: <defaults>
</compile_context>

<pallas_src>
import functools

import jax
import jax.numpy as jnp
from jax.experimental import pallas as pl
from jax.experimental.pallas import tpu as pltpu


def _round_up(x, m):
    return ((x + m - 1) // m) * m


def _tpu_budget_info():
    """Per-TensorCore VMEM capacity (bytes) and a 2-TensorCore (v7x-class) flag.

    Correctness never depends on this; only the batch-block / grid-length
    heuristics do, so it is robust to get_tpu_info() shape changes."""
    vmem = 64 << 20  # conservative default (v7x per-TC VMEM)
    try:
        info = pltpu.get_tpu_info()
        vmem = int(getattr(info, "vmem_capacity_bytes", vmem))
    except Exception:
        pass
    two_tc = vmem <= (64 << 20)   # v7x-class: 64 MiB/TC, 2 TCs/chip
    return vmem, two_tc


def _pick_block_n(n, hw, k_pad, cm_pad, *, two_tc, budget_bytes):
    """Largest batch block Nb that (a) divides N, (b) keeps the grid length >= 2
    only on two-TensorCore chips (v7x), and (c) whose ACTUAL lane-padded,
    double-buffered VMEM footprint (bf16 im2col block x2 + f32 conv activations)
    fits the per-generation budget."""
    best = 1
    for nb in range(1, n + 1):
        if n % nb:
            continue
        if two_tc and n > 1 and n // nb < 2:
            continue
        per_block = nb * hw * (2 * k_pad * 2      # bf16 im2col block, double-buffered
                               + cm_pad * 4)      # f32 conv activations (y)
        if per_block > budget_bytes:
            continue
        best = max(best, nb)
    return best


# -----------------------------------------------------------------------------
# Fused kernel: conv-as-matmul + bias + ReLU + GAP + Linear, one block of Nb images
# -----------------------------------------------------------------------------
def _spnet_fused_kernel(cols_ref, w_ref, cb_ref, fcw_ref, fcb_ref, o_ref, *, Nb, HW):
    # cols_ref: (Nb*HW, K_pad)    lane-dense bf16 im2col rows for Nb images
    # w_ref   : (K_pad, Cm_pad)   im2col-ordered conv weight, lane-padded, bf16
    # cb_ref  : (1, Cm_pad)       conv bias, lane-padded, f32
    # fcw_ref : (Cm_pad, Cc_pad)  classifier weight, lane-padded, bf16
    # fcb_ref : (1, Cc_pad)       classifier bias, lane-padded, f32
    # o_ref   : (1, Nb, Cc_pad)   lane-dense logits output block, f32

    # ---- conv3x3 as ONE lane-dense matmul (f32 accumulation) + bias + ReLU ----
    y = jnp.dot(cols_ref[...], w_ref[...], preferred_element_type=jnp.float32)
    y = jnp.maximum(y + cb_ref[...], 0.0)                      # (Nb*HW, Cm_pad) f32

    # ---- global average pool: tile-preserving reshape + f32 sublane reduce ----
    cm_pad = y.shape[-1]
    pooled = jnp.sum(y.reshape(Nb, HW, cm_pad), axis=1) * jnp.float32(1.0 / HW)

    # ---- fused classifier: Linear(num_maps -> num_classes), lane-padded -------
    logits = jnp.dot(pooled.astype(jnp.bfloat16), fcw_ref[...],
                     preferred_element_type=jnp.float32) + fcb_ref[...]
    o_ref[0] = logits                                          # (Nb, Cc_pad) full-lane store


# -----------------------------------------------------------------------------
# Wrapper: full SPNetWSL forward (eval mode)
# -----------------------------------------------------------------------------
def spnet_wsl_forward(x_nchw, params, *, block_n=None):
    N, Cin, H, W = x_nchw.shape
    KH, KW, _, Cmaps = params["conv_w"].shape
    num_classes = params["fc_w"].shape[1]
    ph, pw = KH // 2, KW // 2
    HW = H * W
    K = KH * KW * Cin

    K_pad = _round_up(K, 128)             # lane-dense im2col contraction dim
    Cm_pad = _round_up(Cmaps, 128)        # lane-dense conv/pooled channels
    Cc_pad = _round_up(num_classes, 128)  # lane-dense logits

    # ---- wrapper-side (XLA) glue: NCHW -> NHWC, zero-pad, im2col, lane-pad, bf16 ----
    x_nhwc = jnp.transpose(x_nchw, (0, 2, 3, 1))
    x_padded = jnp.pad(x_nhwc, ((0, 0), (ph, ph), (pw, pw), (0, 0)))
    taps = [x_padded[:, kh:kh + H, kw:kw + W, :]
            for kh in range(KH) for kw in range(KW)]
    cols = jnp.concatenate(taps, axis=-1).reshape(N * HW, K)       # (N*HW, K)
    cols = jnp.pad(cols, ((0, 0), (0, K_pad - K))).astype(jnp.bfloat16)

    # ---- param prep: 2-D im2col-ordered, lane-padded bf16 matmul operands ----
    w2d = params["conv_w"].reshape(K, Cmaps)
    w2d = jnp.pad(w2d, ((0, K_pad - K), (0, Cm_pad - Cmaps))).astype(jnp.bfloat16)
    cb = jnp.pad(params["conv_b"], (0, Cm_pad - Cmaps)).reshape(1, Cm_pad).astype(jnp.float32)
    fcw = jnp.pad(params["fc_w"],
                  ((0, Cm_pad - Cmaps), (0, Cc_pad - num_classes))).astype(jnp.bfloat16)
    fcb = jnp.pad(params["fc_b"], (0, Cc_pad - num_classes)).reshape(1, Cc_pad).astype(jnp.float32)

    # ---- per-generation block sizing with real (lane-padded) VMEM accounting ----
    vmem_cap, two_tc = _tpu_budget_info()
    budget = min(vmem_cap // 4, 24 << 20)
    Nb = block_n if block_n is not None else _pick_block_n(
        N, HW, K_pad, Cm_pad, two_tc=two_tc, budget_bytes=budget)
    assert N % Nb == 0, "batch must be divisible by the batch block"
    grid = (N // Nb,)

    vmem_need = (2 * Nb * HW * K_pad * 2                       # double-buffered bf16 cols block
                 + Nb * HW * Cm_pad * 4                        # f32 conv activations
                 + 2 * (K_pad * Cm_pad + Cm_pad * Cc_pad) * 2  # bf16 weights (double-buffered)
                 + 2 * (Cm_pad + Cc_pad) * 4                   # biases
                 + 2 * Nb * Cc_pad * 4                         # output block
                 + (4 << 20))                                  # compiler-temporary headroom
    vmem_limit = int(min(max(vmem_need, 16 << 20), 32 << 20))

    kernel = functools.partial(_spnet_fused_kernel, Nb=Nb, HW=HW)

    out = pl.pallas_call(
        kernel,
        out_shape=jax.ShapeDtypeStruct((N // Nb, Nb, Cc_pad), jnp.float32),
        grid_spec=pltpu.PrefetchScalarGridSpec(
            num_scalar_prefetch=0,
            grid=grid,
            in_specs=[
                pl.BlockSpec((Nb * HW, K_pad), lambda n: (n, 0)),
                pl.BlockSpec((K_pad, Cm_pad), lambda n: (0, 0)),
                pl.BlockSpec((1, Cm_pad), lambda n: (0, 0)),
                pl.BlockSpec((Cm_pad, Cc_pad), lambda n: (0, 0)),
                pl.BlockSpec((1, Cc_pad), lambda n: (0, 0)),
            ],
            out_specs=pl.BlockSpec((1, Nb, Cc_pad), lambda n: (n, 0, 0)),
        ),
        compiler_params=pltpu.CompilerParams(
            dimension_semantics=("parallel",),
            vmem_limit_bytes=vmem_limit,
        ),
    )(cols, w2d, cb, fcw, fcb)

    return out.reshape(N, Cc_pad)[:, :num_classes]


# -----------------------------------------------------------------------------
# Pure-JAX f32 reference for verification
# -----------------------------------------------------------------------------
def reference_forward(x_nchw, params):
    w_oihw = jnp.transpose(params["conv_w"], (3, 2, 0, 1))  # HWIO -> OIHW
    y = jax.lax.conv_general_dilated(
        x_nchw, w_oihw, window_strides=(1, 1), padding="SAME",
        dimension_numbers=("NCHW", "OIHW", "NCHW"),
    ) + params["conv_b"][None, :, None, None]
    y = jnp.maximum(y, 0.0)
    y = jnp.mean(y, axis=(2, 3))                            # (N, num_maps)
    return y @ params["fc_w"] + params["fc_b"]


if __name__ == "__main__":
    # Small shapes consistent with the module's forward.
    N, Cin, H, W = 2, 4, 16, 16
    num_maps, num_classes = 32, 8

    key = jax.random.PRNGKey(0)
    k0, k1, k2, k3, k4 = jax.random.split(key, 5)

    x = jax.random.normal(k0, (N, Cin, H, W), dtype=jnp.float32)  # NCHW like PyTorch

    params = {
        "conv_w": 0.1 * jax.random.normal(k1, (3, 3, Cin, num_maps), jnp.float32),  # HWIO
        "conv_b": 0.1 * jax.random.normal(k2, (num_maps,), jnp.float32),
        "fc_w": 0.1 * jax.random.normal(k3, (num_maps, num_classes), jnp.float32),
        "fc_b": 0.1 * jax.random.normal(k4, (num_classes,), jnp.float32),
    }

    out = jax.block_until_ready(spnet_wsl_forward(x, params))
    ref = jax.block_until_ready(reference_forward(x, params))

    assert out.shape == (N, num_classes)
    # bf16 MXU operands vs f32 reference -> loosened (still tight) tolerance
    assert jnp.allclose(out, ref, atol=2e-2, rtol=2e-2), "mismatch vs reference"
    print("KERNEL_OK")
</pallas_src>

<mosaic_0001>
module attributes {stable_mosaic.version = 11 : i64} {
  func.func @_spnet_fused_kernel(%arg0: i32, %arg1: memref<256x128xbf16, #tpu.memory_space<vmem>>, %arg2: memref<128x128xbf16, #tpu.memory_space<vmem>>, %arg3: memref<1x128xf32, #tpu.memory_space<vmem>>, %arg4: memref<128x128xbf16, #tpu.memory_space<vmem>>, %arg5: memref<1x128xf32, #tpu.memory_space<vmem>>, %arg6: memref<1x1x128xf32, #tpu.memory_space<vmem>>) attributes {dimension_semantics = [#tpu.dimension_semantics<parallel>], iteration_bounds = array<i64: 2>, scalar_prefetch = 0 : i64, scratch_operands = 0 : i64, tpu.core_type = #tpu.core_type<tc>, window_params = [{transform_indices = @transform_0, window_bounds = array<i64: 256, 128>}, {pipeline_mode = #tpu.pipeline_mode<synchronous>, transform_indices = @transform_1, window_bounds = array<i64: 128, 128>}, {pipeline_mode = #tpu.pipeline_mode<synchronous>, transform_indices = @transform_2, window_bounds = array<i64: 1, 128>}, {pipeline_mode = #tpu.pipeline_mode<synchronous>, transform_indices = @transform_3, window_bounds = array<i64: 128, 128>}, {pipeline_mode = #tpu.pipeline_mode<synchronous>, transform_indices = @transform_4, window_bounds = array<i64: 1, 128>}, {transform_indices = @transform_5, window_bounds = array<i64: 1, 1, 128>}]} {
    %c0 = arith.constant 0 : index
    %c0_0 = arith.constant 0 : index
    %0 = vector.load %arg1[%c0, %c0_0] : memref<256x128xbf16, #tpu.memory_space<vmem>>, vector<256x128xbf16>
    %c0_1 = arith.constant 0 : index
    %c0_2 = arith.constant 0 : index
    %1 = vector.load %arg2[%c0_1, %c0_2] : memref<128x128xbf16, #tpu.memory_space<vmem>>, vector<128x128xbf16>
    %cst = arith.constant dense<0.000000e+00> : vector<256x128xf32>
    %2 = tpu.matmul %0, %1, %cst {dimension_numbers = #tpu.dot_dimension_numbers<[1], [0], [0], [1], [0, 0, 1, 1], [], []>} : vector<256x128xbf16>, vector<128x128xbf16>, vector<256x128xf32> -> vector<256x128xf32>
    %c0_3 = arith.constant 0 : index
    %c0_4 = arith.constant 0 : index
    %3 = vector.load %arg3[%c0_3, %c0_4] : memref<1x128xf32, #tpu.memory_space<vmem>>, vector<1x128xf32>
    %4 = vector.broadcast %3 : vector<1x128xf32> to vector<256x128xf32>
    %5 = arith.addf %2, %4 : vector<256x128xf32>
    %cst_5 = arith.constant 0.000000e+00 : f32
    %6 = vector.broadcast %cst_5 : f32 to vector<256x128xf32>
    %7 = arith.maximumf %5, %6 : vector<256x128xf32>
    %8 = vector.shape_cast %7 : vector<256x128xf32> to vector<1x256x128xf32>
    %cst_6 = arith.constant dense<0.000000e+00> : vector<1x128xf32>
    %9 = vector.multi_reduction <add>, %8, %cst_6 [1] : vector<1x256x128xf32> to vector<1x128xf32>
    %cst_7 = arith.constant 3.906250e-03 : f32
    %10 = vector.broadcast %cst_7 : f32 to vector<1x128xf32>
    %11 = arith.mulf %9, %10 : vector<1x128xf32>
    %12 = arith.truncf %11 : vector<1x128xf32> to vector<1x128xbf16>
    %c0_8 = arith.constant 0 : index
    %c0_9 = arith.constant 0 : index
    %13 = vector.load %arg4[%c0_8, %c0_9] : memref<128x128xbf16, #tpu.memory_space<vmem>>, vector<128x128xbf16>
    %cst_10 = arith.constant dense<0.000000e+00> : vector<1x128xf32>
    %14 = tpu.matmul %12, %13, %cst_10 {dimension_numbers = #tpu.dot_dimension_numbers<[1], [0], [0], [1], [0, 0, 1, 1], [], []>} : vector<1x128xbf16>, vector<128x128xbf16>, vector<1x128xf32> -> vector<1x128xf32>
    %c0_11 = arith.constant 0 : index
    %c0_12 = arith.constant 0 : index
    %15 = vector.load %arg5[%c0_11, %c0_12] : memref<1x128xf32, #tpu.memory_space<vmem>>, vector<1x128xf32>
    %16 = arith.addf %14, %15 : vector<1x128xf32>
    %c0_13 = arith.constant 0 : index
    %c0_14 = arith.constant 0 : index
    %c0_15 = arith.constant 0 : index
    %17 = vector.load %arg6[%c0_13, %c0_14, %c0_15] : memref<1x1x128xf32, #tpu.memory_space<vmem>>, vector<1x1x128xf32>
    %18 = vector.shape_cast %17 : vector<1x1x128xf32> to vector<1x128xf32>
    %19 = vector.shape_cast %16 : vector<1x128xf32> to vector<1x1x128xf32>
    tpu.vector_store %arg6[%c0_13, %c0_14, %c0_15], %19 {strides = array<i32>} : memref<1x1x128xf32, #tpu.memory_space<vmem>>, vector<1x1x128xf32>,
    return
  }
  func.func @transform_0(%arg0: i32) -> (i32, i32) {
    %c0_i32 = arith.constant 0 : i32
    %c0_i32_0 = arith.constant 0 : i32
    return %arg0, %c0_i32 : i32, i32
  }
  func.func @transform_1(%arg0: i32) -> (i32, i32) {
    %c0_i32 = arith.constant 0 : i32
    %c0_i32_0 = arith.constant 0 : i32
    %c0_i32_1 = arith.constant 0 : i32
    return %c0_i32, %c0_i32_0 : i32, i32
  }
  func.func @transform_2(%arg0: i32) -> (i32, i32) {
    %c0_i32 = arith.constant 0 : i32
    %c0_i32_0 = arith.constant 0 : i32
    %c0_i32_1 = arith.constant 0 : i32
    return %c0_i32, %c0_i32_0 : i32, i32
  }
  func.func @transform_3(%arg0: i32) -> (i32, i32) {
    %c0_i32 = arith.constant 0 : i32
    %c0_i32_0 = arith.constant 0 : i32
    %c0_i32_1 = arith.constant 0 : i32
    return %c0_i32, %c0_i32_0 : i32, i32
  }
  func.func @transform_4(%arg0: i32) -> (i32, i32) {
    %c0_i32 = arith.constant 0 : i32
    %c0_i32_0 = arith.constant 0 : i32
    %c0_i32_1 = arith.constant 0 : i32
    return %c0_i32, %c0_i32_0 : i32, i32
  }
  func.func @transform_5(%arg0: i32) -> (i32, i32, i32) {
    %c0_i32 = arith.constant 0 : i32
    %c0_i32_0 = arith.constant 0 : i32
    %c0_i32_1 = arith.constant 0 : i32
    return %arg0, %c0_i32, %c0_i32_0 : i32, i32, i32
  }
}

</mosaic_0001>

<llo_original>
// kernel: tpu_custom_call.1
$region0: #{tpu_custom_call.1}
  #allocation0 [shape = 'u32[]', space=smem, size = 0x4, offset = 0x4, fixed_abs, tag = 'smem constant byte address 0x4 - core index']
  #allocation1 [shape = 'u32[144,128]{1,0:T(1,128)}', space=vmem, size = 0x12000, scoped, tag = 'internal scratch']
  %s0 = inlined_call_operand.hbm [shape: bf16[512,128], index: 0, kind: input, shape index: {}]
  %s1 = inlined_call_operand.hbm [shape: bf16[128,128], index: 1, kind: input, shape index: {}]
  %s2 = inlined_call_operand.vmem [shape: f32[1,128], index: 2, kind: input, shape index: {}]
  %s3 = inlined_call_operand.hbm [shape: bf16[128,128], index: 3, kind: input, shape index: {}]
  %s4 = inlined_call_operand.vmem [shape: f32[1,128], index: 4, kind: input, shape index: {}]
  %s5 = inlined_call_operand.hbm [shape: f32[2,1,128], index: 5, kind: output, shape index: {}]
  %s6 = sld [smem:[#allocation0]]
  $region65: #{tpu_custom_call.1} parent=0
    _
  %s8 = ssub.s32 1, %s6
  %s9 = scalar_select 0, %s8, %s6
  $region1: #{tpu_custom_call.1} parent=0
    #allocation2 [shape = 'u8[131072]{0}', space=vmem, size = 0x20000, scoped, tag = 'input window, operand 0']
    #allocation3 [shape = 's32[2]{0}', space=sflag, size = 0x8, scoped, tag = 'scoped memory for tpu_custom_call.1']
    #allocation4 [shape = 's32[2]{0}', space=sflag, size = 0x8, scoped, tag = 'scoped memory for tpu_custom_call.1']
    #allocation5 [shape = 'u8[32768]{0}', space=vmem, size = 0x8000, scoped, tag = 'input window, operand 1, single buffered']
    #allocation6 [shape = 's32[1]{0}', space=sflag, size = 0x4, scoped, tag = 'scoped memory for tpu_custom_call.1']
    #allocation7 [shape = 'u8[32768]{0}', space=vmem, size = 0x8000, scoped, tag = 'input window, operand 3, single buffered']
    #allocation8 [shape = 'u8[1024]{0}', space=vmem, size = 0x400, scoped, tag = 'output window, operand 0']
    %10 = vsyncpa [#allocation3], 0
    %s11 = scalar_lea.sflag [#allocation3], 1
    %12 = vsyncpa %s11, 0
    %13 = vsyncpa [#allocation6], 0
    %14 = vsyncpa [#allocation4], 0
    %s15 = scalar_lea.sflag [#allocation4], 1
    %16 = vsyncpa %s15, 0
    loop: start=0, step=1, limit=4
    $region2: #{tpu_custom_call.1} parent=1 // loop_pre_header
      _
    $region3: #{tpu_custom_call.1} parent=1 // loop_header
      %s18 = sphi 0, %s22
      %p19 = scmp.ge.s32.totalorder %s18, 4
      %s28 = sphi 0, %s30
      %s31 = sphi 0, %s28
      %s32 = sphi 0, %s31
      %s48 = sphi 0, %s32
      %s52 = sphi 0, %s52
      %s54 = sphi 0, %s52
      %s55 = sphi 0, %s54
      %s69 = sphi 0, %s55
      %s73 = sphi 0, %s73
      %s75 = sphi 0, %s73
      %s76 = sphi 0, %s75
      %s90 = sphi 0, %s76
      %s94 = sphi 0, %s94
      %s96 = sphi 0, %s94
      %s97 = sphi 0, %s96
      %s111 = sphi 0, %s97
      %s115 = sphi 0, %s115
      %s117 = sphi 0, %s115
      %s118 = sphi 0, %s117
      %s132 = sphi 0, %s118
      %s138 = sphi 0, %s140
      %s141 = sphi 0, %s138
      %s142 = sphi 0, %s141
      %s158 = sphi 0, %s142
    $region4: #{tpu_custom_call.1} parent=1 // loop_header_branch
      %21 = sbr.rel (%p19) target = $region8
    $region5: #{tpu_custom_call.1} parent=1 // loop_body
      %s23 = ssub.s32 %s18, 1
      %s24 = ssub.s32 %s18, 2
      %s25 = sadd.s32 %s18, 1
      %s26 = ssub.s32 %s18, %s25
      %p27 = scmp.eq.s32.totalorder %s26, 0
      %s29 = sadd.s32 %s28, 1
      %s30 = scalar_select %p27, %s28, %s29
      %p33 = pneg %p27
      %p34 = scmp.eq.s32.totalorder %s18, 1
      %p35 = por %p33, %p34
      %p36 = scmp.ne.s32.totalorder %s28, %s31
      %p37 = scmp.eq.s32.totalorder %s18, 0
      %p38 = por %p36, %p37
      %p39 = scmp.ne.s32.totalorder %s28, %s31
      %p40 = scmp.eq.s32.totalorder %s23, 1
      %p41 = por %p39, %p40
      %p42 = scmp.ne.s32.totalorder %s31, %s32
      %p43 = scmp.eq.s32.totalorder %s23, 0
      %p44 = por %p42, %p43
      %p45 = scmp.ne.s32.totalorder %s31, %s32
      %p46 = scmp.eq.s32.totalorder %s24, 1
      %p47 = por %p45, %p46
      %p49 = scmp.ne.s32.totalorder %s32, %s48
      %p50 = scmp.eq.s32.totalorder %s24, 0
      %p51 = por %p49, %p50
      %s53 = sadd.s32 %s52, 1
      %p56 = scmp.eq.s32.totalorder %s18, 1
      %p57 = scmp.ne.s32.totalorder %s52, %s54
      %p58 = scmp.eq.s32.totalorder %s18, 0
      %p59 = por %p57, %p58
      %p60 = scmp.ne.s32.totalorder %s52, %s54
      %p61 = scmp.eq.s32.totalorder %s23, 1
      %p62 = por %p60, %p61
      %p63 = scmp.ne.s32.totalorder %s54, %s55
      %p64 = scmp.eq.s32.totalorder %s23, 0
      %p65 = por %p63, %p64
      %p66 = scmp.ne.s32.totalorder %s54, %s55
      %p67 = scmp.eq.s32.totalorder %s24, 1
      %p68 = por %p66, %p67
      %p70 = scmp.ne.s32.totalorder %s55, %s69
      %p71 = scmp.eq.s32.totalorder %s24, 0
      %p72 = por %p70, %p71
      %s74 = sadd.s32 %s73, 1
      %p77 = scmp.eq.s32.totalorder %s18, 1
      %p78 = scmp.ne.s32.totalorder %s73, %s75
      %p79 = scmp.eq.s32.totalorder %s18, 0
      %p80 = por %p78, %p79
      %p81 = scmp.ne.s32.totalorder %s73, %s75
      %p82 = scmp.eq.s32.totalorder %s23, 1
      %p83 = por %p81, %p82
      %p84 = scmp.ne.s32.totalorder %s75, %s76
      %p85 = scmp.eq.s32.totalorder %s23, 0
      %p86 = por %p84, %p85
      %p87 = scmp.ne.s32.totalorder %s75, %s76
      %p88 = scmp.eq.s32.totalorder %s24, 1
      %p89 = por %p87, %p88
      %p91 = scmp.ne.s32.totalorder %s76, %s90
      %p92 = scmp.eq.s32.totalorder %s24, 0
      %p93 = por %p91, %p92
      %s95 = sadd.s32 %s94, 1
      %p98 = scmp.eq.s32.totalorder %s18, 1
      %p99 = scmp.ne.s32.totalorder %s94, %s96
      %p100 = scmp.eq.s32.totalorder %s18, 0
      %p101 = por %p99, %p100
      %p102 = scmp.ne.s32.totalorder %s94, %s96
      %p103 = scmp.eq.s32.totalorder %s23, 1
      %p104 = por %p102, %p103
      %p105 = scmp.ne.s32.totalorder %s96, %s97
      %p106 = scmp.eq.s32.totalorder %s23, 0
      %p107 = por %p105, %p106
      %p108 = scmp.ne.s32.totalorder %s96, %s97
      %p109 = scmp.eq.s32.totalorder %s24, 1
      %p110 = por %p108, %p109
      %p112 = scmp.ne.s32.totalorder %s97, %s111
      %p113 = scmp.eq.s32.totalorder %s24, 0
      %p114 = por %p112, %p113
      %s116 = sadd.s32 %s115, 1
      %p119 = scmp.eq.s32.totalorder %s18, 1
      %p120 = scmp.ne.s32.totalorder %s115, %s117
      %p121 = scmp.eq.s32.totalorder %s18, 0
      %p122 = por %p120, %p121
      %p123 = scmp.ne.s32.totalorder %s115, %s117
      %p124 = scmp.eq.s32.totalorder %s23, 1
      %p125 = por %p123, %p124
      %p126 = scmp.ne.s32.totalorder %s117, %s118
      %p127 = scmp.eq.s32.totalorder %s23, 0
      %p128 = por %p126, %p127
      %p129 = scmp.ne.s32.totalorder %s117, %s118
      %p130 = scmp.eq.s32.totalorder %s24, 1
      %p131 = por %p129, %p130
      %p133 = scmp.ne.s32.totalorder %s118, %s132
      %p134 = scmp.eq.s32.totalorder %s24, 0
      %p135 = por %p133, %p134
      %s136 = ssub.s32 %s18, %s25
      %p137 = scmp.eq.s32.totalorder %s136, 0
      %s139 = sadd.s32 %s138, 1
      %s140 = scalar_select %p137, %s138, %s139
      %p143 = pneg %p137
      %p144 = scmp.eq.s32.totalorder %s18, 1
      %p145 = por %p143, %p144
      %p146 = scmp.ne.s32.totalorder %s138, %s141
      %p147 = scmp.eq.s32.totalorder %s18, 0
      %p148 = por %p146, %p147
      %p149 = scmp.ne.s32.totalorder %s138, %s141
      %p150 = scmp.eq.s32.totalorder %s23, 1
      %p151 = por %p149, %p150
      %p152 = scmp.ne.s32.totalorder %s141, %s142
      %p153 = scmp.eq.s32.totalorder %s23, 0
      %p154 = por %p152, %p153
      %p155 = scmp.ne.s32.totalorder %s141, %s142
      %p156 = scmp.eq.s32.totalorder %s24, 1
      %p157 = por %p155, %p156
      %p159 = scmp.ne.s32.totalorder %s142, %s158
      %p160 = scmp.eq.s32.totalorder %s24, 0
      %p161 = por %p159, %p160
      %p162 = scmp.le.s32.totalorder 1, %s18
      %p163 = scmp.lt.s32.totalorder %s18, 3
      %p164 = pnand %p162, %p163
      %p165 = pneg %p164
      // Predicated region
      $region9: #{tpu_custom_call.1} parent=5 // pred_check
        _
      $region10: #{tpu_custom_call.1} parent=5 // pred_check_branch
        %167 = sbr.rel (%p164) target = $region12
      $region11: #{tpu_custom_call.1} parent=5 // pred_region
        %s168 = ssub.s32 %s18, 1
        // Predicated region
        $region13: #{tpu_custom_call.1} parent=11 // pred_check
          %p169 = pneg %p65
        $region14: #{tpu_custom_call.1} parent=11 // pred_check_branch
          %171 = sbr.rel (%p169) target = $region16
        $region15: #{tpu_custom_call.1} parent=11 // pred_region
          %s173 = ssub.s32 1024, 1024
          %174 = vsyncadd [#allocation6], %s173
          %s175 = sshll.u32 [#allocation5], 4
          %s176 = int_to_ptr.vmem [resolvable:$true] %s175
          %181 = dma.hbm_to_vmem [thread:$0]  %s1, 1024, %s176, [#allocation6], 64, 64, 4
        $region16: #{tpu_custom_call.1} parent=11 // pred_fallthru
          _
        // Predicated region
        $region17: #{tpu_custom_call.1} parent=11 // pred_check
          %p182 = pneg %p86
        $region18: #{tpu_custom_call.1} parent=11 // pred_check_branch
          %184 = sbr.rel (%p182) target = $region20
        $region19: #{tpu_custom_call.1} parent=11 // pred_region
          _
        $region20: #{tpu_custom_call.1} parent=11 // pred_fallthru
          _
        // Predicated region
        $region21: #{tpu_custom_call.1} parent=11 // pred_check
          %p185 = pneg %p107
        $region22: #{tpu_custom_call.1} parent=11 // pred_check_branch
          %187 = sbr.rel (%p185) target = $region24
        $region23: #{tpu_custom_call.1} parent=11 // pred_region
          %s189 = ssub.s32 1024, 1024
          %190 = vsyncadd [#allocation6], %s189
          %s191 = sshll.u32 [#allocation7], 4
          %s192 = int_to_ptr.vmem [resolvable:$true] %s191
          %197 = dma.hbm_to_vmem [thread:$0]  %s3, 1024, %s192, [#allocation6], 64, 64, 4
        $region24: #{tpu_custom_call.1} parent=11 // pred_fallthru
          _
        // Predicated region
        $region25: #{tpu_custom_call.1} parent=11 // pred_check
          %p198 = pneg %p128
        $region26: #{tpu_custom_call.1} parent=11 // pred_check_branch
          %200 = sbr.rel (%p198) target = $region28
        $region27: #{tpu_custom_call.1} parent=11 // pred_region
          _
        $region28: #{tpu_custom_call.1} parent=11 // pred_fallthru
          _
      $region12: #{tpu_custom_call.1} parent=5 // pred_fallthru
        _
      %p201 = scmp.lt.s32.totalorder %s18, 2
      // Predicated region
      $region29: #{tpu_custom_call.1} parent=5 // pred_check
        %p202 = pneg %p201
      $region30: #{tpu_custom_call.1} parent=5 // pred_check_branch
        %204 = sbr.rel (%p202) target = $region32
      $region31: #{tpu_custom_call.1} parent=5 // pred_region
        // Predicated region
        $region33: #{tpu_custom_call.1} parent=31 // pred_check
          %p205 = pneg %p38
        $region34: #{tpu_custom_call.1} parent=31 // pred_check_branch
          %207 = sbr.rel (%p205) target = $region36
        $region35: #{tpu_custom_call.1} parent=31 // pred_region
          %s208 = sand.u32 %s28, 1
          %s209 = scalar_lea.sflag [#allocation3], %s208
          %s210 = sand.u32 %s28, 1
          %s211 = smul.addr %s210, 128
          %s212 = scalar_lea.vmem [#allocation2], %s211
          %s213 = smul.u32 32, %s18
          %s215 = ssub.s32 2048, 2048
          %216 = vsyncadd %s209, %s215
          %s217 = smul.addr %s213, 64
          %s218 = scalar_lea.hbm %s0, %s217
          %s219 = sshll.u32 %s212, 4
          %s220 = int_to_ptr.vmem [resolvable:$true] %s219
          %225 = dma.hbm_to_vmem [thread:$0]  %s218, 2048, %s220, %s209, 64, 64, 4
        $region36: #{tpu_custom_call.1} parent=31 // pred_fallthru
          _
      $region32: #{tpu_custom_call.1} parent=5 // pred_fallthru
        _
      %p226 = scmp.le.s32.totalorder 1, %s18
      %p227 = scmp.lt.s32.totalorder %s18, 3
      %p228 = pnand %p226, %p227
      %p229 = pneg %p228
      // Predicated region
      $region37: #{tpu_custom_call.1} parent=5 // pred_check
        _
      $region38: #{tpu_custom_call.1} parent=5 // pred_check_branch
        %231 = sbr.rel (%p228) target = $region40
      $region39: #{tpu_custom_call.1} parent=5 // pred_region
        %s232 = ssub.s32 %s18, 1
        %s233 = sand.u32 %s31, 1
        %s234 = scalar_lea.sflag [#allocation3], %s233
        %s235 = sand.u32 %s31, 1
        %s236 = smul.addr %s235, 128
        %s237 = scalar_lea.vmem [#allocation2], %s236
        // Predicated region
        $region41: #{tpu_custom_call.1} parent=39 // pred_check
          %p238 = pneg %p44
        $region42: #{tpu_custom_call.1} parent=39 // pred_check_branch
          %240 = sbr.rel (%p238) target = $region44
        $region43: #{tpu_custom_call.1} parent=39 // pred_region
          %241 = dma.done %s234, 2048
        $region44: #{tpu_custom_call.1} parent=39 // pred_fallthru
          _
        // Predicated region
        $region45: #{tpu_custom_call.1} parent=39 // pred_check
          %p242 = pneg %p65
        $region46: #{tpu_custom_call.1} parent=39 // pred_check_branch
          %244 = sbr.rel (%p242) target = $region48
        $region47: #{tpu_custom_call.1} parent=39 // pred_region
          %245 = dma.done [#allocation6], 1024
        $region48: #{tpu_custom_call.1} parent=39 // pred_fallthru
          _
        // Predicated region
        $region49: #{tpu_custom_call.1} parent=39 // pred_check
          %p246 = pneg %p107
        $region50: #{tpu_custom_call.1} parent=39 // pred_check_branch
          %248 = sbr.rel (%p246) target = $region52
        $region51: #{tpu_custom_call.1} parent=39 // pred_region
          %249 = dma.done [#allocation6], 1024
        $region52: #{tpu_custom_call.1} parent=39 // pred_fallthru
          _
        %s250 = sand.u32 %s31, 1
        %s251 = scalar_lea.sflag [#allocation3], %s250
        %s252 = sand.u32 %s31, 1
        %s253 = smul.addr %s252, 128
        %s254 = scalar_lea.vmem [#allocation2], %s253
        %p255 = pneg %p44
        %p256 = pneg %p41
        %p257 = pneg %p65
        %p258 = pneg %p62
        %p259 = pneg %p86
        %p260 = pneg %p83
        %p261 = pneg %p107
        %p262 = pneg %p104
        %p263 = pneg %p128
        %p264 = pneg %p125
        %p265 = pneg %p154
        %p266 = pneg %p151
        %s267 = sand.u32 %s141, 1
        %s268 = scalar_lea.sflag [#allocation4], %s267
        %s269 = sand.u32 %s141, 1
        %s270 = scalar_lea.vmem [#allocation8], %s269
        %s271 = smul.u32 32, %s23
        %v273 = vld [vmem:[%s237] sm:$0xf]
        %v274 = vld [vmem:[%s237 + $0x4] sm:$0xf]
        %v275 = vld [vmem:[%s237 + $0x8] sm:$0xf]
        %v276 = vld [vmem:[%s237 + $0xc] sm:$0xf]
        %v277 = vld [vmem:[%s237 + $0x10] sm:$0xf]
        %v278 = vld [vmem:[%s237 + $0x14] sm:$0xf]
        %v279 = vld [vmem:[%s237 + $0x18] sm:$0xf]
        %v280 = vld [vmem:[%s237 + $0x1c] sm:$0xf]
        %v281 = vld [vmem:[%s237 + $0x20] sm:$0xf]
        %v282 = vld [vmem:[%s237 + $0x24] sm:$0xf]
        %v283 = vld [vmem:[%s237 + $0x28] sm:$0xf]
        %v284 = vld [vmem:[%s237 + $0x2c] sm:$0xf]
        %v285 = vld [vmem:[%s237 + $0x30] sm:$0xf]
        %v286 = vld [vmem:[%s237 + $0x34] sm:$0xf]
        %v287 = vld [vmem:[%s237 + $0x38] sm:$0xf]
        %v288 = vld [vmem:[%s237 + $0x3c] sm:$0xf]
        %v289 = vld [vmem:[%s237 + $0x40] sm:$0xf]
        %v290 = vld [vmem:[%s237 + $0x44] sm:$0xf]
        %v291 = vld [vmem:[%s237 + $0x48] sm:$0xf]
        %v292 = vld [vmem:[%s237 + $0x4c] sm:$0xf]
        %v293 = vld [vmem:[%s237 + $0x50] sm:$0xf]
        %v294 = vld [vmem:[%s237 + $0x54] sm:$0xf]
        %v295 = vld [vmem:[%s237 + $0x58] sm:$0xf]
        %v296 = vld [vmem:[%s237 + $0x5c] sm:$0xf]
        %v297 = vld [vmem:[%s237 + $0x60] sm:$0xf]
        %v298 = vld [vmem:[%s237 + $0x64] sm:$0xf]
        %v299 = vld [vmem:[%s237 + $0x68] sm:$0xf]
        %v300 = vld [vmem:[%s237 + $0x6c] sm:$0xf]
        %v301 = vld [vmem:[%s237 + $0x70] sm:$0xf]
        %v302 = vld [vmem:[%s237 + $0x74] sm:$0xf]
        %v303 = vld [vmem:[%s237 + $0x78] sm:$0xf]
        %v304 = vld [vmem:[%s237 + $0x7c] sm:$0xf]
        %v305 = vld [vmem:[#allocation5] sm:$0xf]
        %v306 = vld [vmem:[#allocation5 + $0x4] sm:$0xf]
        %v307 = vld [vmem:[#allocation5 + $0x8] sm:$0xf]
        %v308 = vld [vmem:[#allocation5 + $0xc] sm:$0xf]
        %v309 = vld [vmem:[#allocation5 + $0x10] sm:$0xf]
        %v310 = vld [vmem:[#allocation5 + $0x14] sm:$0xf]
        %v311 = vld [vmem:[#allocation5 + $0x18] sm:$0xf]
        %v312 = vld [vmem:[#allocation5 + $0x1c] sm:$0xf]
        %v313 = vld [vmem:[#allocation5 + $0x20] sm:$0xf]
        %v314 = vld [vmem:[#allocation5 + $0x24] sm:$0xf]
        %v315 = vld [vmem:[#allocation5 + $0x28] sm:$0xf]
        %v316 = vld [vmem:[#allocation5 + $0x2c] sm:$0xf]
        %v317 = vld [vmem:[#allocation5 + $0x30] sm:$0xf]
        %v318 = vld [vmem:[#allocation5 + $0x34] sm:$0xf]
        %v319 = vld [vmem:[#allocation5 + $0x38] sm:$0xf]
        %v320 = vld [vmem:[#allocation5 + $0x3c] sm:$0xf]
        %v321 = vld [vmem:[%s2] sm:$0x1]
        %v323 = vlaneseq
        %v324 = vshrl.u32 %v323, 7
        %v325 = vsub.s32 0, %v324
        %v326 = vrot.slane %v321, %v325
        %v360 = vunpack.c.l.b16 %v273
        %v361 = vunpack.c.l.b16 %v274
        %v362 = vunpack.c.l.b16 %v275
        %v363 = vunpack.c.l.b16 %v276
        %v364 = vunpack.c.l.b16 %v277
        %v365 = vunpack.c.l.b16 %v278
        %v366 = vunpack.c.l.b16 %v279
        %v367 = vunpack.c.l.b16 %v280
        %v368 = vunpack.c.l.b16 %v281
        %v369 = vunpack.c.l.b16 %v282
        %v370 = vunpack.c.l.b16 %v283
        %v371 = vunpack.c.l.b16 %v284
        %v372 = vunpack.c.l.b16 %v285
        %v373 = vunpack.c.l.b16 %v286
        %v374 = vunpack.c.l.b16 %v287
        %v375 = vunpack.c.l.b16 %v288
        %v376 = vunpack.c.l.b16 %v289
        %v377 = vunpack.c.l.b16 %v290
        %v378 = vunpack.c.l.b16 %v291
        %v379 = vunpack.c.l.b16 %v292
        %v380 = vunpack.c.l.b16 %v293
        %v381 = vunpack.c.l.b16 %v294
        %v382 = vunpack.c.l.b16 %v295
        %v383 = vunpack.c.l.b16 %v296
        %v384 = vunpack.c.l.b16 %v297
        %v385 = vunpack.c.l.b16 %v298
        %v386 = vunpack.c.l.b16 %v299
        %v387 = vunpack.c.l.b16 %v300
        %v388 = vunpack.c.l.b16 %v301
        %v389 = vunpack.c.l.b16 %v302
        %v390 = vunpack.c.l.b16 %v303
        %v391 = vunpack.c.l.b16 %v304
        %v392 = vpack.c.b16 %v361, %v360
        %v393 = vpack.c.b16 %v363, %v362
        %v394 = vpack.c.b16 %v365, %v364
        %v395 = vpack.c.b16 %v367, %v366
        %v396 = vpack.c.b16 %v369, %v368
        %v397 = vpack.c.b16 %v371, %v370
        %v398 = vpack.c.b16 %v373, %v372
        %v399 = vpack.c.b16 %v375, %v374
        %v400 = vpack.c.b16 %v377, %v376
        %v401 = vpack.c.b16 %v379, %v378
        %v402 = vpack.c.b16 %v381, %v380
        %v403 = vpack.c.b16 %v383, %v382
        %v404 = vpack.c.b16 %v385, %v384
        %v405 = vpack.c.b16 %v387, %v386
        %v406 = vpack.c.b16 %v389, %v388
        %v407 = vpack.c.b16 %v391, %v390
        %v440 = vunpack.c.l.b16 %v305
        %v441 = vunpack.c.l.b16 %v306
        %v442 = vunpack.c.l.b16 %v307
        %v443 = vunpack.c.l.b16 %v308
        %v444 = vunpack.c.l.b16 %v309
        %v445 = vunpack.c.l.b16 %v310
        %v446 = vunpack.c.l.b16 %v311
        %v447 = vunpack.c.l.b16 %v312
        %v448 = vunpack.c.l.b16 %v313
        %v449 = vunpack.c.l.b16 %v314
        %v450 = vunpack.c.l.b16 %v315
        %v451 = vunpack.c.l.b16 %v316
        %v452 = vunpack.c.l.b16 %v317
        %v453 = vunpack.c.l.b16 %v318
        %v454 = vunpack.c.l.b16 %v319
        %v455 = vunpack.c.l.b16 %v320
        %v456 = vpack.c.b16 %v441, %v440
        %v457 = vpack.c.b16 %v443, %v442
        %v458 = vpack.c.b16 %v445, %v444
        %v459 = vpack.c.b16 %v447, %v446
        %v460 = vpack.c.b16 %v449, %v448
        %v461 = vpack.c.b16 %v451, %v450
        %v462 = vpack.c.b16 %v453, %v452
        %v463 = vpack.c.b16 %v455, %v454
        %472 = vmatprep.subr.bf16.mxu0 0
        %473 = vmatpush1.bf16.msra.mxu0 %v456
        %474 = vmatprep.subr.bf16.mxu0 0
        %475 = vmatpush1.bf16.msra.mxu0 %v457
        %476 = vmatprep.subr.bf16.mxu0 0
        %477 = vmatpush1.bf16.msra.mxu0 %v458
        %478 = vmatprep.subr.bf16.mxu0 0
        %479 = vmatpush1.bf16.msra.mxu0 %v459
        %480 = vmatprep.subr.bf16.mxu0 0
        %481 = vmatpush1.bf16.msra.mxu0 %v460
        %482 = vmatprep.subr.bf16.mxu0 0
        %483 = vmatpush1.bf16.msra.mxu0 %v461
        %484 = vmatprep.subr.bf16.mxu0 0
        %485 = vmatpush1.bf16.msra.mxu0 %v462
        %486 = vmatprep.subr.bf16.mxu0 0
        %487 = vmatpush1.bf16.msra.mxu0 %v463
        %488 = vmatprep.subr.bf16.mxu0 0
        %489 = vmatpush1.bf16.msra.mxu0 0
        %490 = vmatprep.subr.bf16.mxu0 0
        %491 = vmatpush1.bf16.msra.mxu0 0
        %492 = vmatprep.subr.bf16.mxu0 0
        %493 = vmatpush1.bf16.msra.mxu0 0
        %494 = vmatprep.subr.bf16.mxu0 0
        %495 = vmatpush1.bf16.msra.mxu0 0
        %496 = vmatprep.subr.bf16.mxu0 0
        %497 = vmatpush1.bf16.msra.mxu0 0
        %498 = vmatprep.subr.bf16.mxu0 0
        %499 = vmatpush1.bf16.msra.mxu0 0
        %500 = vmatprep.subr.bf16.mxu0 0
        %501 = vmatpush1.bf16.msra.mxu0 0
        %502 = vmatprep.subr.bf16.mxu0 0
        %503 = vmatpush1.bf16.msra.mxu0 0
        %504 = vmatprep.mubr.bf16.mxu0 0
        %505 = vmatmul.mubr.bf16.gmra.mrb[0].mxu0 %v392
        %v506 = vpop.f32.mrb[0].mxu0
        %v507 = vadd.f32 %v326, %v506
        %v508 = vpop.f32.mrb[0].mxu0
        %v509 = vpop.f32.mrb[0].mxu0
        %v510 = vadd.f32 %v326, %v509
        %v511 = vpop.f32.mrb[0].mxu0
        %512 = vmatprep.mubr.bf16.mxu0 0
        %513 = vmatmul.mubr.bf16.gmra.mrb[0].mxu0 %v393
        %v514 = vpop.f32.mrb[0].mxu0
        %v515 = vadd.f32 %v326, %v514
        %v516 = vpop.f32.mrb[0].mxu0
        %v517 = vpop.f32.mrb[0].mxu0
        %v518 = vadd.f32 %v326, %v517
        %v519 = vpop.f32.mrb[0].mxu0
        %520 = vmatprep.mubr.bf16.mxu0 0
        %521 = vmatmul.mubr.bf16.gmra.mrb[0].mxu0 %v394
        %v522 = vpop.f32.mrb[0].mxu0
        %v523 = vadd.f32 %v326, %v522
        %v524 = vpop.f32.mrb[0].mxu0
        %v525 = vpop.f32.mrb[0].mxu0
        %v526 = vadd.f32 %v326, %v525
        %v527 = vpop.f32.mrb[0].mxu0
        %528 = vmatprep.mubr.bf16.mxu0 0
        %529 = vmatmul.mubr.bf16.gmra.mrb[0].mxu0 %v395
        %v530 = vpop.f32.mrb[0].mxu0
        %v531 = vadd.f32 %v326, %v530
        %v532 = vpop.f32.mrb[0].mxu0
        %v533 = vpop.f32.mrb[0].mxu0
        %v534 = vadd.f32 %v326, %v533
        %v535 = vpop.f32.mrb[0].mxu0
        %536 = vmatprep.mubr.bf16.mxu0 0
        %537 = vmatmul.mubr.bf16.gmra.mrb[0].mxu0 %v396
        %v538 = vpop.f32.mrb[0].mxu0
        %v539 = vadd.f32 %v326, %v538
        %v540 = vpop.f32.mrb[0].mxu0
        %v541 = vpop.f32.mrb[0].mxu0
        %v542 = vadd.f32 %v326, %v541
        %v543 = vpop.f32.mrb[0].mxu0
        %544 = vmatprep.mubr.bf16.mxu0 0
        %545 = vmatmul.mubr.bf16.gmra.mrb[0].mxu0 %v397
        %v546 = vpop.f32.mrb[0].mxu0
        %v547 = vadd.f32 %v326, %v546
        %v548 = vpop.f32.mrb[0].mxu0
        %v549 = vpop.f32.mrb[0].mxu0
        %v550 = vadd.f32 %v326, %v549
        %v551 = vpop.f32.mrb[0].mxu0
        %552 = vmatprep.mubr.bf16.mxu0 0
        %553 = vmatmul.mubr.bf16.gmra.mrb[0].mxu0 %v398
        %v554 = vpop.f32.mrb[0].mxu0
        %v555 = vadd.f32 %v326, %v554
        %v556 = vpop.f32.mrb[0].mxu0
        %v557 = vpop.f32.mrb[0].mxu0
        %v558 = vadd.f32 %v326, %v557
        %v559 = vpop.f32.mrb[0].mxu0
        %560 = vmatprep.mubr.bf16.mxu0 0
        %561 = vmatmul.mubr.bf16.gmra.mrb[0].mxu0 %v399
        %v562 = vpop.f32.mrb[0].mxu0
        %v563 = vadd.f32 %v326, %v562
        %v564 = vpop.f32.mrb[0].mxu0
        %v565 = vpop.f32.mrb[0].mxu0
        %v566 = vadd.f32 %v326, %v565
        %v567 = vpop.f32.mrb[0].mxu0
        %568 = vmatprep.mubr.bf16.mxu0 0
        %569 = vmatmul.mubr.bf16.gmra.mrb[0].mxu0 %v400
        %v570 = vpop.f32.mrb[0].mxu0
        %v571 = vadd.f32 %v326, %v570
        %v572 = vpop.f32.mrb[0].mxu0
        %v573 = vpop.f32.mrb[0].mxu0
        %v574 = vadd.f32 %v326, %v573
        %v575 = vpop.f32.mrb[0].mxu0
        %576 = vmatprep.mubr.bf16.mxu0 0
        %577 = vmatmul.mubr.bf16.gmra.mrb[0].mxu0 %v401
        %v578 = vpop.f32.mrb[0].mxu0
        %v579 = vadd.f32 %v326, %v578
        %v580 = vpop.f32.mrb[0].mxu0
        %v581 = vpop.f32.mrb[0].mxu0
        %v582 = vadd.f32 %v326, %v581
        %v583 = vpop.f32.mrb[0].mxu0
        %584 = vmatprep.mubr.bf16.mxu0 0
        %585 = vmatmul.mubr.bf16.gmra.mrb[0].mxu0 %v402
        %v586 = vpop.f32.mrb[0].mxu0
        %v587 = vadd.f32 %v326, %v586
        %v588 = vpop.f32.mrb[0].mxu0
        %v589 = vpop.f32.mrb[0].mxu0
        %v590 = vadd.f32 %v326, %v589
        %v591 = vpop.f32.mrb[0].mxu0
        %592 = vmatprep.mubr.bf16.mxu0 0
        %593 = vmatmul.mubr.bf16.gmra.mrb[0].mxu0 %v403
        %v594 = vpop.f32.mrb[0].mxu0
        %v595 = vadd.f32 %v326, %v594
        %v596 = vpop.f32.mrb[0].mxu0
        %v597 = vpop.f32.mrb[0].mxu0
        %v598 = vadd.f32 %v326, %v597
        %v599 = vpop.f32.mrb[0].mxu0
        %600 = vmatprep.mubr.bf16.mxu0 0
        %601 = vmatmul.mubr.bf16.gmra.mrb[0].mxu0 %v404
        %v602 = vpop.f32.mrb[0].mxu0
        %v603 = vadd.f32 %v326, %v602
        %v604 = vpop.f32.mrb[0].mxu0
        %v605 = vpop.f32.mrb[0].mxu0
        %v606 = vadd.f32 %v326, %v605
        %v607 = vpop.f32.mrb[0].mxu0
        %608 = vmatprep.mubr.bf16.mxu0 0
        %609 = vmatmul.mubr.bf16.gmra.mrb[0].mxu0 %v405
        %v610 = vpop.f32.mrb[0].mxu0
        %v611 = vadd.f32 %v326, %v610
        %v612 = vpop.f32.mrb[0].mxu0
        %v613 = vpop.f32.mrb[0].mxu0
        %v614 = vadd.f32 %v326, %v613
        %v615 = vpop.f32.mrb[0].mxu0
        %616 = vmatprep.mubr.bf16.mxu0 0
        %617 = vmatmul.mubr.bf16.gmra.mrb[0].mxu0 %v406
        %v618 = vpop.f32.mrb[0].mxu0
        %v619 = vadd.f32 %v326, %v618
        %v620 = vpop.f32.mrb[0].mxu0
        %v621 = vpop.f32.mrb[0].mxu0
        %v622 = vadd.f32 %v326, %v621
        %v623 = vpop.f32.mrb[0].mxu0
        %624 = vmatprep.mubr.bf16.mxu0 0
        %625 = vmatmul.mubr.bf16.gmra.mrb[0].mxu0 %v407
        %v626 = vpop.f32.mrb[0].mxu0
        %v627 = vadd.f32 %v326, %v626
        %v628 = vpop.f32.mrb[0].mxu0
        %v629 = vpop.f32.mrb[0].mxu0
        %v630 = vadd.f32 %v326, %v629
        %v631 = vpop.f32.mrb[0].mxu0
        %632 = vdwg.mxu0
        %v633 = vmax.f32 %v507, 0.0
        %v634 = vmax.f32 %v510, 0.0
        %v635 = vmax.f32 %v515, 0.0
        %v636 = vmax.f32 %v518, 0.0
        %v637 = vmax.f32 %v523, 0.0
        %v638 = vmax.f32 %v526, 0.0
        %v639 = vmax.f32 %v531, 0.0
        %v640 = vmax.f32 %v534, 0.0
        %v641 = vmax.f32 %v539, 0.0
        %v642 = vmax.f32 %v542, 0.0
        %v643 = vmax.f32 %v547, 0.0
        %v644 = vmax.f32 %v550, 0.0
        %v645 = vmax.f32 %v555, 0.0
        %v646 = vmax.f32 %v558, 0.0
        %v647 = vmax.f32 %v563, 0.0
        %v648 = vmax.f32 %v566, 0.0
        %v649 = vmax.f32 %v571, 0.0
        %v650 = vmax.f32 %v574, 0.0
        %v651 = vmax.f32 %v579, 0.0
        %v652 = vmax.f32 %v582, 0.0
        %v653 = vmax.f32 %v587, 0.0
        %v654 = vmax.f32 %v590, 0.0
        %v655 = vmax.f32 %v595, 0.0
        %v656 = vmax.f32 %v598, 0.0
        %v657 = vmax.f32 %v603, 0.0
        %v658 = vmax.f32 %v606, 0.0
        %v659 = vmax.f32 %v611, 0.0
        %v660 = vmax.f32 %v614, 0.0
        %v661 = vmax.f32 %v619, 0.0
        %v662 = vmax.f32 %v622, 0.0
        %v663 = vmax.f32 %v627, 0.0
        %v664 = vmax.f32 %v630, 0.0
        %v665 = vadd.f32 %v633, %v634
        %v666 = vadd.f32 %v665, %v635
        %v667 = vadd.f32 %v666, %v636
        %v668 = vadd.f32 %v667, %v637
        %v669 = vadd.f32 %v668, %v638
        %v670 = vadd.f32 %v669, %v639
        %v671 = vadd.f32 %v670, %v640
        %v672 = vadd.f32 %v671, %v641
        %v673 = vadd.f32 %v672, %v642
        %v674 = vadd.f32 %v673, %v643
        %v675 = vadd.f32 %v674, %v644
        %v676 = vadd.f32 %v675, %v645
        %v677 = vadd.f32 %v676, %v646
        %v678 = vadd.f32 %v677, %v647
        %v679 = vadd.f32 %v678, %v648
        %v680 = vadd.f32 %v679, %v649
        %v681 = vadd.f32 %v680, %v650
        %v682 = vadd.f32 %v681, %v651
        %v683 = vadd.f32 %v682, %v652
        %v684 = vadd.f32 %v683, %v653
        %v685 = vadd.f32 %v684, %v654
        %v686 = vadd.f32 %v685, %v655
        %v687 = vadd.f32 %v686, %v656
        %v688 = vadd.f32 %v687, %v657
        %v689 = vadd.f32 %v688, %v658
        %v690 = vadd.f32 %v689, %v659
        %v691 = vadd.f32 %v690, %v660
        %v692 = vadd.f32 %v691, %v661
        %v693 = vadd.f32 %v692, %v662
        %v694 = vadd.f32 %v693, %v663
        %v695 = vadd.f32 %v694, %v664
        %v696 = vrot.slane %v695, 4
        %v697 = vadd.f32 %v695, %v696
        %v698 = vrot.slane %v697, 2
        %v699 = vadd.f32 %v697, %v698
        %v700 = vrot.slane %v699, 1
        %v701 = vadd.f32 %v699, %v700
        %v702 = vmul.f32 %v701, 0.00390625
        %v703 = vpack.c.bf16 %v702, %v702
        %v704 = vld [vmem:[#allocation7] sm:$0xf]
        %v705 = vld [vmem:[#allocation7 + $0x4] sm:$0xf]
        %v706 = vld [vmem:[#allocation7 + $0x8] sm:$0xf]
        %v707 = vld [vmem:[#allocation7 + $0xc] sm:$0xf]
        %v708 = vld [vmem:[#allocation7 + $0x10] sm:$0xf]
        %v709 = vld [vmem:[#allocation7 + $0x14] sm:$0xf]
        %v710 = vld [vmem:[#allocation7 + $0x18] sm:$0xf]
        %v711 = vld [vmem:[#allocation7 + $0x1c] sm:$0xf]
        %v712 = vld [vmem:[#allocation7 + $0x20] sm:$0xf]
        %v713 = vld [vmem:[#allocation7 + $0x24] sm:$0xf]
        %v714 = vld [vmem:[#allocation7 + $0x28] sm:$0xf]
        %v715 = vld [vmem:[#allocation7 + $0x2c] sm:$0xf]
        %v716 = vld [vmem:[#allocation7 + $0x30] sm:$0xf]
        %v717 = vld [vmem:[#allocation7 + $0x34] sm:$0xf]
        %v718 = vld [vmem:[#allocation7 + $0x38] sm:$0xf]
        %v719 = vld [vmem:[#allocation7 + $0x3c] sm:$0xf]
        %v720 = vld [vmem:[%s4] sm:$0x1]
        %v737 = vunpack.c.l.b16 %v704
        %v738 = vunpack.c.l.b16 %v705
        %v739 = vunpack.c.l.b16 %v706
        %v740 = vunpack.c.l.b16 %v707
        %v741 = vunpack.c.l.b16 %v708
        %v742 = vunpack.c.l.b16 %v709
        %v743 = vunpack.c.l.b16 %v710
        %v744 = vunpack.c.l.b16 %v711
        %v745 = vunpack.c.l.b16 %v712
        %v746 = vunpack.c.l.b16 %v713
        %v747 = vunpack.c.l.b16 %v714
        %v748 = vunpack.c.l.b16 %v715
        %v749 = vunpack.c.l.b16 %v716
        %v750 = vunpack.c.l.b16 %v717
        %v751 = vunpack.c.l.b16 %v718
        %v752 = vunpack.c.l.b16 %v719
        %v753 = vpack.c.b16 %v738, %v737
        %v754 = vpack.c.b16 %v740, %v739
        %v755 = vpack.c.b16 %v742, %v741
        %v756 = vpack.c.b16 %v744, %v743
        %v757 = vpack.c.b16 %v746, %v745
        %v758 = vpack.c.b16 %v748, %v747
        %v759 = vpack.c.b16 %v750, %v749
        %v760 = vpack.c.b16 %v752, %v751
        %769 = vmatprep.subr.bf16.mxu0 0
        %770 = vmatpush1.bf16.msra.mxu0 %v753
        %771 = vmatprep.subr.bf16.mxu0 0
        %772 = vmatpush1.bf16.msra.mxu0 %v754
        %773 = vmatprep.subr.bf16.mxu0 0
        %774 = vmatpush1.bf16.msra.mxu0 %v755
        %775 = vmatprep.subr.bf16.mxu0 0
        %776 = vmatpush1.bf16.msra.mxu0 %v756
        %777 = vmatprep.subr.bf16.mxu0 0
        %778 = vmatpush1.bf16.msra.mxu0 %v757
        %779 = vmatprep.subr.bf16.mxu0 0
        %780 = vmatpush1.bf16.msra.mxu0 %v758
        %781 = vmatprep.subr.bf16.mxu0 0
        %782 = vmatpush1.bf16.msra.mxu0 %v759
        %783 = vmatprep.subr.bf16.mxu0 0
        %784 = vmatpush1.bf16.msra.mxu0 %v760
        %785 = vmatprep.subr.bf16.mxu0 0
        %786 = vmatpush1.bf16.msra.mxu0 0
        %787 = vmatprep.subr.bf16.mxu0 0
        %788 = vmatpush1.bf16.msra.mxu0 0
        %789 = vmatprep.subr.bf16.mxu0 0
        %790 = vmatpush1.bf16.msra.mxu0 0
        %791 = vmatprep.subr.bf16.mxu0 0
        %792 = vmatpush1.bf16.msra.mxu0 0
        %793 = vmatprep.subr.bf16.mxu0 0
        %794 = vmatpush1.bf16.msra.mxu0 0
        %795 = vmatprep.subr.bf16.mxu0 0
        %796 = vmatpush1.bf16.msra.mxu0 0
        %797 = vmatprep.subr.bf16.mxu0 0
        %798 = vmatpush1.bf16.msra.mxu0 0
        %799 = vmatprep.subr.bf16.mxu0 0
        %800 = vmatpush1.bf16.msra.mxu0 0
        %801 = vmatprep.mubr.bf16.mxu0 0
        %802 = vmatmul.mubr.bf16.gmra.mrb[0].mxu0 %v703
        %v803 = vpop.f32.mrb[0].mxu0
        %v804 = vadd.f32 %v720, %v803
        %v805 = vpop.f32.mrb[0].mxu0
        %v806 = vpop.f32.mrb[0].mxu0
        %v807 = vpop.f32.mrb[0].mxu0
        %808 = vdwg.mxu0
        %809 = vst [vmem:[%s270] sm:$0x1] %v804
        %s810 = sand.u32 %s141, 1
        %s811 = scalar_lea.sflag [#allocation4], %s810
        %s812 = sand.u32 %s141, 1
        %s813 = scalar_lea.vmem [#allocation8], %s812
        // Predicated region
        $region53: #{tpu_custom_call.1} parent=39 // pred_check
          %p814 = pneg %p151
        $region54: #{tpu_custom_call.1} parent=39 // pred_check_branch
          %816 = sbr.rel (%p814) target = $region56
        $region55: #{tpu_custom_call.1} parent=39 // pred_region
          %s818 = ssub.s32 16, 16
          %819 = vsyncadd %s811, %s818
          %s820 = smul.addr %s23, 16
          %s821 = scalar_lea.hbm %s5, %s820
          %s823 = sshll.u32 %s813, 4
          %s824 = int_to_ptr.vmem [resolvable:$true] %s823
          %826 = dma.vmem_to_hbm [thread:$0]  %s824, 16, %s821, %s811
        $region56: #{tpu_custom_call.1} parent=39 // pred_fallthru
          _
      $region40: #{tpu_custom_call.1} parent=5 // pred_fallthru
        _
      %p827 = scmp.le.s32.totalorder 2, %s18
      // Predicated region
      $region57: #{tpu_custom_call.1} parent=5 // pred_check
        %p828 = pneg %p827
      $region58: #{tpu_custom_call.1} parent=5 // pred_check_branch
        %830 = sbr.rel (%p828) target = $region60
      $region59: #{tpu_custom_call.1} parent=5 // pred_region
        %s831 = ssub.s32 %s18, 2
        // Predicated region
        $region61: #{tpu_custom_call.1} parent=59 // pred_check
          %p832 = pneg %p157
        $region62: #{tpu_custom_call.1} parent=59 // pred_check_branch
          %834 = sbr.rel (%p832) target = $region64
        $region63: #{tpu_custom_call.1} parent=59 // pred_region
          %s835 = sand.u32 %s142, 1
          %s836 = scalar_lea.sflag [#allocation4], %s835
          %s837 = sand.u32 %s142, 1
          %s838 = scalar_lea.vmem [#allocation8], %s837
          %839 = dma.done %s836, 16
        $region64: #{tpu_custom_call.1} parent=59 // pred_fallthru
          _
      $region60: #{tpu_custom_call.1} parent=5 // pred_fallthru
        _
    $region6: #{tpu_custom_call.1} parent=1 // loop_footer
      %s22 = sadd.s32 1, %s18
    $region7: #{tpu_custom_call.1} parent=1 // loop_footer_branch
      %17 = sbr.rel target = $region3
    $region8: #{tpu_custom_call.1} parent=1 // loop_exit
      _
    %840 = vsyncpa [#allocation3], 1
    %s841 = scalar_lea.sflag [#allocation3], 1
    %842 = vsyncpa %s841, 1
    %843 = vsyncpa [#allocation6], 1
    %844 = vsyncpa [#allocation4], 1
    %s845 = scalar_lea.sflag [#allocation4], 1
    %846 = vsyncpa %s845, 1

</llo_original>
